<compile_context>
chip_gen: v6e
topology: v6e:2x2x1
jax: 0.10.0
libtpu: 0.0.40
codegen_flags: <defaults>
</compile_context>

<pallas_src>
import functools
import math

import jax
import jax.numpy as jnp
from jax import lax
from jax.experimental import pallas as pl
from jax.experimental.pallas import tpu as pltpu

_C = 1.0 / math.sqrt(2.0 * math.pi)
_LANES = 128


def _rbf_kernel(w0_ref, b0_ref, w1_ref, b1_ref, x_ref, o_ref, *, chunk, unroll):
    # x_ref / o_ref: (tile_rows, 128) f32 blocks, batch laid out lane-dense.
    # w0/b0: (N,) f32 SMEM; w1: (N,) f32 SMEM with 1/sqrt(2*pi) pre-folded;
    # b1: (1,) f32 SMEM.
    n = w0_ref.shape[0]
    tile_rows = x_ref.shape[0]
    n_chunks = tile_rows // chunk

    def body(ci, carry):
        r0 = pl.multiple_of(ci * chunk, chunk)
        x = x_ref[pl.ds(r0, chunk), :]
        # Accumulator starts at the output bias (saves a zero-fill + final add).
        acc = jnp.full(x.shape, b1_ref[0], jnp.float32)
        for j in range(n):                                 # N tiny & static -> unrolled
            h = x * w0_ref[j] + b0_ref[j]                  # linear0 column j (VPU)
            acc = acc + jnp.exp(h * h * -0.5) * w1_ref[j]  # EUP exp + VPU madd (C folded)
        o_ref[pl.ds(r0, chunk), :] = acc
        return carry

    lax.fori_loop(0, n_chunks, body, 0, unroll=unroll)


def _pick_chunk(tile_rows):
    # Largest chunk <= 128 rows (multiple of 8) that divides tile_rows.
    for c in range(min(128, tile_rows), 7, -8):
        if tile_rows % c == 0:
            return c
    return tile_rows


def rbfnet_reference(x, w0, b0, w1, b1):
    h = x @ w0 + b0
    return (jnp.exp(-0.5 * h * h) * _C) @ w1 + b1


def rbfnet_forward(x, w0, b0, w1, b1, *, max_tile_rows=2048, min_kernel_batch=1024):
    """x: (B, 1); w0: (1, N); b0: (1, N); w1: (N, 1); b1: (1, 1) -> (B, 1)."""
    B = x.shape[0]

    # Small batches: launch + pad/unpad HBM traffic dominates — plain XLA path.
    if B < min_kernel_batch:
        return rbfnet_reference(
            x.astype(jnp.float32), w0.astype(jnp.float32), b0.astype(jnp.float32),
            w1.astype(jnp.float32), b1.astype(jnp.float32))

    w0f = w0.reshape(-1).astype(jnp.float32)
    b0f = b0.reshape(-1).astype(jnp.float32)
    w1f = (w1.reshape(-1) * _C).astype(jnp.float32)   # fold 1/sqrt(2*pi) into weights
    b1f = b1.reshape(-1).astype(jnp.float32)

    # Minimal lane-dense padding: rows is a multiple of 8 only (NOT of tile_rows).
    rows = max(8, pl.cdiv(B, _LANES))
    rows = ((rows + 7) // 8) * 8
    tile_rows = min(max_tile_rows, rows)
    # v7x: keep >= 2 grid steps so both TensorCores get work when possible.
    if rows // tile_rows < 2 and rows >= 16:
        tile_rows = max(8, (((rows + 1) // 2) + 7) // 8 * 8)
    chunk = _pick_chunk(tile_rows)
    n_chunks = tile_rows // chunk
    unroll = n_chunks <= 32
    grid = (pl.cdiv(rows, tile_rows),)   # trailing partial block handled by Pallas

    pad = rows * _LANES - B
    x2d = jnp.pad(x.reshape(-1).astype(jnp.float32), (0, pad)).reshape(rows, _LANES)

    smem = pl.BlockSpec(memory_space=pltpu.MemorySpace.SMEM)
    kernel = functools.partial(_rbf_kernel, chunk=chunk, unroll=unroll)
    out2d = pl.pallas_call(
        kernel,
        out_shape=jax.ShapeDtypeStruct((rows, _LANES), jnp.float32),
        grid=grid,
        in_specs=[smem, smem, smem, smem,
                  pl.BlockSpec((tile_rows, _LANES), lambda i: (i, 0))],
        out_specs=pl.BlockSpec((tile_rows, _LANES), lambda i: (i, 0)),
        compiler_params=pltpu.CompilerParams(
            dimension_semantics=("parallel",)),
    )(w0f, b0f, w1f, b1f, x2d)

    return out2d.reshape(-1)[:B].reshape(B, 1)


if __name__ == "__main__":
    N = 5      # number of RBF units (module default n=5)

    key = jax.random.PRNGKey(0)
    k_x, k_w0, k_b0, k_w1, k_b1 = jax.random.split(key, 5)

    # Deterministic parameter init (mimicking nn.Linear uniform ranges).
    bound1 = 1.0 / math.sqrt(N)
    w0 = jax.random.uniform(k_w0, (1, N), jnp.float32, -1.0, 1.0)        # linear0.weight^T
    b0 = jax.random.uniform(k_b0, (1, N), jnp.float32, -1.0, 1.0)        # linear0.bias
    w1 = jax.random.uniform(k_w1, (N, 1), jnp.float32, -bound1, bound1)  # linear1.weight^T
    b1 = jax.random.uniform(k_b1, (1, 1), jnp.float32, -bound1, bound1)  # linear1.bias

    # 1) Small batch forced through the kernel (single tile, single chunk).
    x_small = jax.random.normal(k_x, (8, 1), dtype=jnp.float32)
    y = jax.block_until_ready(
        rbfnet_forward(x_small, w0, b0, w1, b1, min_kernel_batch=0))
    y_ref = rbfnet_reference(x_small, w0, b0, w1, b1)
    assert y.shape == (8, 1)
    assert jnp.allclose(y, y_ref, atol=1e-5, rtol=1e-5)

    # 2) Small batch, default path (XLA fallback — no pad/launch overhead).
    y_fb = jax.block_until_ready(rbfnet_forward(x_small, w0, b0, w1, b1))
    assert jnp.allclose(y_fb, y_ref, atol=1e-5, rtol=1e-5)

    # 3) Mid batch through the kernel: grid split into >= 2 parallel steps.
    x_mid = jax.random.normal(k_x, (2048, 1), dtype=jnp.float32)
    y_mid = jax.block_until_ready(rbfnet_forward(x_mid, w0, b0, w1, b1))
    y_mid_ref = rbfnet_reference(x_mid, w0, b0, w1, b1)
    assert y_mid.shape == (2048, 1)
    assert jnp.allclose(y_mid, y_mid_ref, atol=1e-5, rtol=1e-5)

    # 4) Batch whose row count does not divide the tile: exercises the
    #    trailing partial grid block and the in-kernel row-chunk loop.
    x_big = jax.random.normal(k_x, (50000, 1), dtype=jnp.float32)
    y_big = jax.block_until_ready(rbfnet_forward(x_big, w0, b0, w1, b1))
    y_big_ref = rbfnet_reference(x_big, w0, b0, w1, b1)
    assert y_big.shape == (50000, 1)
    assert jnp.allclose(y_big, y_big_ref, atol=1e-5, rtol=1e-5)

    print("KERNEL_OK")
</pallas_src>

<mosaic_0001>
module attributes {stable_mosaic.version = 11 : i64} {
  func.func @_rbf_kernel(%arg0: i32, %arg1: memref<5xf32, #tpu.memory_space<smem>>, %arg2: memref<5xf32, #tpu.memory_space<smem>>, %arg3: memref<5xf32, #tpu.memory_space<smem>>, %arg4: memref<1xf32, #tpu.memory_space<smem>>, %arg5: memref<8x128xf32, #tpu.memory_space<vmem>>, %arg6: memref<8x128xf32, #tpu.memory_space<vmem>>) attributes {dimension_semantics = [#tpu.dimension_semantics<parallel>], iteration_bounds = array<i64: 1>, scalar_prefetch = 0 : i64, scratch_operands = 0 : i64, tpu.core_type = #tpu.core_type<tc>, window_params = [{transform_indices = @transform_0, window_bounds = array<i64: 5>}, {transform_indices = @transform_1, window_bounds = array<i64: 5>}, {transform_indices = @transform_2, window_bounds = array<i64: 5>}, {transform_indices = @transform_3, window_bounds = array<i64: 1>}, {transform_indices = @transform_4, window_bounds = array<i64: 8, 128>}, {transform_indices = @transform_5, window_bounds = array<i64: 8, 128>}]} {
    %c0_i32 = arith.constant 0 : i32
    %c8_i32 = arith.constant 8 : i32
    %0 = arith.muli %c0_i32, %c8_i32 : i32
    %1 = tpu.assume_multiple %0, 8 : i32
    %2 = arith.index_cast %1 : i32 to index
    %c0 = arith.constant 0 : index
    %3 = vector.load %arg5[%2, %c0] : memref<8x128xf32, #tpu.memory_space<vmem>>, vector<8x128xf32>
    %c0_0 = arith.constant 0 : index
    %4 = memref.load %arg4[%c0_0] : memref<1xf32, #tpu.memory_space<smem>>
    %5 = vector.broadcast %4 : f32 to vector<8x128xf32>
    %c0_1 = arith.constant 0 : index
    %6 = memref.load %arg1[%c0_1] : memref<5xf32, #tpu.memory_space<smem>>
    %7 = vector.broadcast %6 : f32 to vector<8x128xf32>
    %8 = arith.mulf %3, %7 : vector<8x128xf32>
    %c0_2 = arith.constant 0 : index
    %9 = memref.load %arg2[%c0_2] : memref<5xf32, #tpu.memory_space<smem>>
    %10 = vector.broadcast %9 : f32 to vector<8x128xf32>
    %11 = arith.addf %8, %10 : vector<8x128xf32>
    %12 = arith.mulf %11, %11 : vector<8x128xf32>
    %cst = arith.constant -5.000000e-01 : f32
    %13 = vector.broadcast %cst : f32 to vector<8x128xf32>
    %14 = arith.mulf %12, %13 : vector<8x128xf32>
    %15 = math.exp %14 : vector<8x128xf32>
    %c0_3 = arith.constant 0 : index
    %16 = memref.load %arg3[%c0_3] : memref<5xf32, #tpu.memory_space<smem>>
    %17 = vector.broadcast %16 : f32 to vector<8x128xf32>
    %18 = arith.mulf %15, %17 : vector<8x128xf32>
    %19 = arith.addf %5, %18 : vector<8x128xf32>
    %c1 = arith.constant 1 : index
    %20 = memref.load %arg1[%c1] : memref<5xf32, #tpu.memory_space<smem>>
    %21 = vector.broadcast %20 : f32 to vector<8x128xf32>
    %22 = arith.mulf %3, %21 : vector<8x128xf32>
    %c1_4 = arith.constant 1 : index
    %23 = memref.load %arg2[%c1_4] : memref<5xf32, #tpu.memory_space<smem>>
    %24 = vector.broadcast %23 : f32 to vector<8x128xf32>
    %25 = arith.addf %22, %24 : vector<8x128xf32>
    %26 = arith.mulf %25, %25 : vector<8x128xf32>
    %cst_5 = arith.constant -5.000000e-01 : f32
    %27 = vector.broadcast %cst_5 : f32 to vector<8x128xf32>
    %28 = arith.mulf %26, %27 : vector<8x128xf32>
    %29 = math.exp %28 : vector<8x128xf32>
    %c1_6 = arith.constant 1 : index
    %30 = memref.load %arg3[%c1_6] : memref<5xf32, #tpu.memory_space<smem>>
    %31 = vector.broadcast %30 : f32 to vector<8x128xf32>
    %32 = arith.mulf %29, %31 : vector<8x128xf32>
    %33 = arith.addf %19, %32 : vector<8x128xf32>
    %c2 = arith.constant 2 : index
    %34 = memref.load %arg1[%c2] : memref<5xf32, #tpu.memory_space<smem>>
    %35 = vector.broadcast %34 : f32 to vector<8x128xf32>
    %36 = arith.mulf %3, %35 : vector<8x128xf32>
    %c2_7 = arith.constant 2 : index
    %37 = memref.load %arg2[%c2_7] : memref<5xf32, #tpu.memory_space<smem>>
    %38 = vector.broadcast %37 : f32 to vector<8x128xf32>
    %39 = arith.addf %36, %38 : vector<8x128xf32>
    %40 = arith.mulf %39, %39 : vector<8x128xf32>
    %cst_8 = arith.constant -5.000000e-01 : f32
    %41 = vector.broadcast %cst_8 : f32 to vector<8x128xf32>
    %42 = arith.mulf %40, %41 : vector<8x128xf32>
    %43 = math.exp %42 : vector<8x128xf32>
    %c2_9 = arith.constant 2 : index
    %44 = memref.load %arg3[%c2_9] : memref<5xf32, #tpu.memory_space<smem>>
    %45 = vector.broadcast %44 : f32 to vector<8x128xf32>
    %46 = arith.mulf %43, %45 : vector<8x128xf32>
    %47 = arith.addf %33, %46 : vector<8x128xf32>
    %c3 = arith.constant 3 : index
    %48 = memref.load %arg1[%c3] : memref<5xf32, #tpu.memory_space<smem>>
    %49 = vector.broadcast %48 : f32 to vector<8x128xf32>
    %50 = arith.mulf %3, %49 : vector<8x128xf32>
    %c3_10 = arith.constant 3 : index
    %51 = memref.load %arg2[%c3_10] : memref<5xf32, #tpu.memory_space<smem>>
    %52 = vector.broadcast %51 : f32 to vector<8x128xf32>
    %53 = arith.addf %50, %52 : vector<8x128xf32>
    %54 = arith.mulf %53, %53 : vector<8x128xf32>
    %cst_11 = arith.constant -5.000000e-01 : f32
    %55 = vector.broadcast %cst_11 : f32 to vector<8x128xf32>
    %56 = arith.mulf %54, %55 : vector<8x128xf32>
    %57 = math.exp %56 : vector<8x128xf32>
    %c3_12 = arith.constant 3 : index
    %58 = memref.load %arg3[%c3_12] : memref<5xf32, #tpu.memory_space<smem>>
    %59 = vector.broadcast %58 : f32 to vector<8x128xf32>
    %60 = arith.mulf %57, %59 : vector<8x128xf32>
    %61 = arith.addf %47, %60 : vector<8x128xf32>
    %c4 = arith.constant 4 : index
    %62 = memref.load %arg1[%c4] : memref<5xf32, #tpu.memory_space<smem>>
    %63 = vector.broadcast %62 : f32 to vector<8x128xf32>
    %64 = arith.mulf %3, %63 : vector<8x128xf32>
    %c4_13 = arith.constant 4 : index
    %65 = memref.load %arg2[%c4_13] : memref<5xf32, #tpu.memory_space<smem>>
    %66 = vector.broadcast %65 : f32 to vector<8x128xf32>
    %67 = arith.addf %64, %66 : vector<8x128xf32>
    %68 = arith.mulf %67, %67 : vector<8x128xf32>
    %cst_14 = arith.constant -5.000000e-01 : f32
    %69 = vector.broadcast %cst_14 : f32 to vector<8x128xf32>
    %70 = arith.mulf %68, %69 : vector<8x128xf32>
    %71 = math.exp %70 : vector<8x128xf32>
    %c4_15 = arith.constant 4 : index
    %72 = memref.load %arg3[%c4_15] : memref<5xf32, #tpu.memory_space<smem>>
    %73 = vector.broadcast %72 : f32 to vector<8x128xf32>
    %74 = arith.mulf %71, %73 : vector<8x128xf32>
    %75 = arith.addf %61, %74 : vector<8x128xf32>
    %76 = arith.index_cast %1 : i32 to index
    %c0_16 = arith.constant 0 : index
    %77 = vector.load %arg6[%76, %c0_16] : memref<8x128xf32, #tpu.memory_space<vmem>>, vector<8x128xf32>
    tpu.vector_store %arg6[%76, %c0_16], %75 {strides = array<i32>} : memref<8x128xf32, #tpu.memory_space<vmem>>, vector<8x128xf32>,
    %c1_i32 = arith.constant 1 : i32
    return
  }
  func.func @transform_0(%arg0: i32) -> i32 {
    %c0_i32 = arith.constant 0 : i32
    %c0_i32_0 = arith.constant 0 : i32
    return %c0_i32 : i32
  }
  func.func @transform_1(%arg0: i32) -> i32 {
    %c0_i32 = arith.constant 0 : i32
    %c0_i32_0 = arith.constant 0 : i32
    return %c0_i32 : i32
  }
  func.func @transform_2(%arg0: i32) -> i32 {
    %c0_i32 = arith.constant 0 : i32
    %c0_i32_0 = arith.constant 0 : i32
    return %c0_i32 : i32
  }
  func.func @transform_3(%arg0: i32) -> i32 {
    %c0_i32 = arith.constant 0 : i32
    %c0_i32_0 = arith.constant 0 : i32
    return %c0_i32 : i32
  }
  func.func @transform_4(%arg0: i32) -> (i32, i32) {
    %c0_i32 = arith.constant 0 : i32
    %c0_i32_0 = arith.constant 0 : i32
    return %arg0, %c0_i32 : i32, i32
  }
  func.func @transform_5(%arg0: i32) -> (i32, i32) {
    %c0_i32 = arith.constant 0 : i32
    %c0_i32_0 = arith.constant 0 : i32
    return %arg0, %c0_i32 : i32, i32
  }
}

</mosaic_0001>

<llo_original>
// kernel: tpu_custom_call.1
$region0: #{tpu_custom_call.1}
  #allocation0 [shape = 'u32[]', space=smem, size = 0x4, offset = 0x4, fixed_abs, tag = 'smem constant byte address 0x4 - core index']
  #allocation1 [shape = 'u32[144,128]{1,0:T(1,128)}', space=vmem, size = 0x12000, scoped, tag = 'internal scratch']
  #allocation2 [shape = 'f32[1]{0:T(128)S(6)}', space=smem, size = 0x200, scoped, tag = 'scoped memory for tpu_custom_call.1']
  %s0 = inlined_call_operand.vmem [shape: f32[5], index: 0, kind: input, shape index: {}]
  %s1 = inlined_call_operand.vmem [shape: f32[5], index: 1, kind: input, shape index: {}]
  %s2 = inlined_call_operand.vmem [shape: f32[5], index: 2, kind: input, shape index: {}]
  %s3 = inlined_call_operand.<no memory space> [shape: f32[1], index: 3, kind: input, shape index: {}]
  %s4 = inlined_call_operand.hbm [shape: f32[8,128], index: 4, kind: input, shape index: {}]
  %s5 = inlined_call_operand.hbm [shape: f32[8,128], index: 5, kind: output, shape index: {}]
  %s6 = sld [smem:[#allocation0]]
  $region46: #{tpu_custom_call.1} parent=0
    _
  %s8 = ssub.s32 1, %s6
  %s9 = scalar_select 0, %s8, %s6
  %10 = sst [smem:[#allocation2]] %s3
  $region1: #{tpu_custom_call.1} parent=0
    #allocation3 [shape = 'u8[512]{0}', space=smem, size = 0x200, scoped, tag = 'input window, operand 0, single buffered']
    #allocation4 [shape = 's32[1]{0}', space=sflag, size = 0x4, scoped, tag = 'scoped memory for tpu_custom_call.1']
    #allocation5 [shape = 's32[1]{0}', space=sflag, size = 0x4, scoped, tag = 'scoped memory for tpu_custom_call.1']
    #allocation6 [shape = 's32[1]{0}', space=sflag, size = 0x4, scoped, tag = 'scoped memory for tpu_custom_call.1']
    #allocation7 [shape = 'u8[512]{0}', space=smem, size = 0x200, scoped, tag = 'input window, operand 1, single buffered']
    #allocation8 [shape = 's32[1]{0}', space=sflag, size = 0x4, scoped, tag = 'scoped memory for tpu_custom_call.1']
    #allocation9 [shape = 'u8[512]{0}', space=smem, size = 0x200, scoped, tag = 'input window, operand 2, single buffered']
    #allocation10 [shape = 'u8[4096]{0}', space=vmem, size = 0x1000, scoped, tag = 'input window, operand 4, single buffered']
    #allocation11 [shape = 'u8[4096]{0}', space=vmem, size = 0x1000, scoped, tag = 'output window, operand 0, single buffered']
    %11 = vsyncpa [#allocation6], 0
    %12 = vsyncpa [#allocation8], 0
    %13 = vsyncpa [#allocation4], 0
    %14 = vsyncpa [#allocation5], 0
    // Predicated region
    $region2: #{tpu_custom_call.1} parent=1 // pred_check
      _
    $region3: #{tpu_custom_call.1} parent=1 // pred_check_branch
      %16 = sbr.rel (0) target = $region5
    $region4: #{tpu_custom_call.1} parent=1 // pred_region
      %s18 = ssub.s32 16, 16
      %19 = vsyncadd [#allocation6], %s18
      %s21 = sshll.u32 %s0, 4
      %s22 = int_to_ptr.vmem [resolvable:$true] %s21
      %24 = dma.vmem_to_smem %s22, 16, [#allocation3], [#allocation6]
    $region5: #{tpu_custom_call.1} parent=1 // pred_fallthru
      _
    // Predicated region
    $region6: #{tpu_custom_call.1} parent=1 // pred_check
      _
    $region7: #{tpu_custom_call.1} parent=1 // pred_check_branch
      %26 = sbr.rel (0) target = $region9
    $region8: #{tpu_custom_call.1} parent=1 // pred_region
      %s28 = ssub.s32 16, 16
      %29 = vsyncadd [#allocation8], %s28
      %s31 = sshll.u32 %s1, 4
      %s32 = int_to_ptr.vmem [resolvable:$true] %s31
      %34 = dma.vmem_to_smem %s32, 16, [#allocation7], [#allocation8]
    $region9: #{tpu_custom_call.1} parent=1 // pred_fallthru
      _
    // Predicated region
    $region10: #{tpu_custom_call.1} parent=1 // pred_check
      _
    $region11: #{tpu_custom_call.1} parent=1 // pred_check_branch
      %36 = sbr.rel (0) target = $region13
    $region12: #{tpu_custom_call.1} parent=1 // pred_region
      %s38 = ssub.s32 16, 16
      %39 = vsyncadd [#allocation8], %s38
      %s41 = sshll.u32 %s2, 4
      %s42 = int_to_ptr.vmem [resolvable:$true] %s41
      %44 = dma.vmem_to_smem %s42, 16, [#allocation9], [#allocation8]
    $region13: #{tpu_custom_call.1} parent=1 // pred_fallthru
      _
    // Predicated region
    $region14: #{tpu_custom_call.1} parent=1 // pred_check
      _
    $region15: #{tpu_custom_call.1} parent=1 // pred_check_branch
      %46 = sbr.rel (0) target = $region17
    $region16: #{tpu_custom_call.1} parent=1 // pred_region
      _
    $region17: #{tpu_custom_call.1} parent=1 // pred_fallthru
      _
    // Predicated region
    $region18: #{tpu_custom_call.1} parent=1 // pred_check
      _
    $region19: #{tpu_custom_call.1} parent=1 // pred_check_branch
      %48 = sbr.rel (0) target = $region21
    $region20: #{tpu_custom_call.1} parent=1 // pred_region
      %s50 = ssub.s32 128, 128
      %51 = vsyncadd [#allocation4], %s50
      %s53 = sshll.u32 [#allocation10], 4
      %s54 = int_to_ptr.vmem [resolvable:$true] %s53
      %56 = dma.hbm_to_vmem [thread:$0]  %s4, 128, %s54, [#allocation4]
    $region21: #{tpu_custom_call.1} parent=1 // pred_fallthru
      _
    // Predicated region
    $region22: #{tpu_custom_call.1} parent=1 // pred_check
      _
    $region23: #{tpu_custom_call.1} parent=1 // pred_check_branch
      %58 = sbr.rel (0) target = $region25
    $region24: #{tpu_custom_call.1} parent=1 // pred_region
      %59 = dma.done [#allocation6], 16
    $region25: #{tpu_custom_call.1} parent=1 // pred_fallthru
      _
    // Predicated region
    $region26: #{tpu_custom_call.1} parent=1 // pred_check
      _
    $region27: #{tpu_custom_call.1} parent=1 // pred_check_branch
      %61 = sbr.rel (0) target = $region29
    $region28: #{tpu_custom_call.1} parent=1 // pred_region
      %62 = dma.done [#allocation8], 16
    $region29: #{tpu_custom_call.1} parent=1 // pred_fallthru
      _
    // Predicated region
    $region30: #{tpu_custom_call.1} parent=1 // pred_check
      _
    $region31: #{tpu_custom_call.1} parent=1 // pred_check_branch
      %64 = sbr.rel (0) target = $region33
    $region32: #{tpu_custom_call.1} parent=1 // pred_region
      %65 = dma.done [#allocation8], 16
    $region33: #{tpu_custom_call.1} parent=1 // pred_fallthru
      _
    // Predicated region
    $region34: #{tpu_custom_call.1} parent=1 // pred_check
      _
    $region35: #{tpu_custom_call.1} parent=1 // pred_check_branch
      %67 = sbr.rel (0) target = $region37
    $region36: #{tpu_custom_call.1} parent=1 // pred_region
      %68 = dma.done [#allocation4], 128
    $region37: #{tpu_custom_call.1} parent=1 // pred_fallthru
      _
    %69 = sfence
    %v70 = vld [vmem:[#allocation10] sm:$0xff]
    %s71 = sld [smem:[#allocation2]]
    %v72 = vstv %s71
    %s73 = sld [smem:[#allocation3]]
    %v74 = vstv %s73
    %v75 = vmul.f32 %v70, %v74
    %s76 = sld [smem:[#allocation7]]
    %v77 = vstv %s76
    %v78 = vadd.f32 %v75, %v77
    %v79 = vmul.f32 %v78, %v78
    %v80 = vmul.f32 %v79, -0.5
    %v81 = vmul.f32 %v80, 1.442695
    %v82 = vpow.pop %v81
    %s83 = sld [smem:[#allocation9]]
    %v84 = vstv %s83
    %v85 = vmul.f32 %v82, %v84
    %v86 = vadd.f32 %v72, %v85
    %s87 = sld [smem:[#allocation3 + $0x1]]
    %v88 = vstv %s87
    %v89 = vmul.f32 %v70, %v88
    %s90 = sld [smem:[#allocation7 + $0x1]]
    %v91 = vstv %s90
    %v92 = vadd.f32 %v89, %v91
    %v93 = vmul.f32 %v92, %v92
    %v94 = vmul.f32 %v93, -0.5
    %v95 = vmul.f32 %v94, 1.442695
    %v96 = vpow.pop %v95
    %s97 = sld [smem:[#allocation9 + $0x1]]
    %v98 = vstv %s97
    %v99 = vmul.f32 %v96, %v98
    %v100 = vadd.f32 %v86, %v99
    %s101 = sld [smem:[#allocation3 + $0x2]]
    %v102 = vstv %s101
    %v103 = vmul.f32 %v70, %v102
    %s104 = sld [smem:[#allocation7 + $0x2]]
    %v105 = vstv %s104
    %v106 = vadd.f32 %v103, %v105
    %v107 = vmul.f32 %v106, %v106
    %v108 = vmul.f32 %v107, -0.5
    %v109 = vmul.f32 %v108, 1.442695
    %v110 = vpow.pop %v109
    %s111 = sld [smem:[#allocation9 + $0x2]]
    %v112 = vstv %s111
    %v113 = vmul.f32 %v110, %v112
    %v114 = vadd.f32 %v100, %v113
    %s115 = sld [smem:[#allocation3 + $0x3]]
    %v116 = vstv %s115
    %v117 = vmul.f32 %v70, %v116
    %s118 = sld [smem:[#allocation7 + $0x3]]
    %v119 = vstv %s118
    %v120 = vadd.f32 %v117, %v119
    %v121 = vmul.f32 %v120, %v120
    %v122 = vmul.f32 %v121, -0.5
    %v123 = vmul.f32 %v122, 1.442695
    %v124 = vpow.pop %v123
    %s125 = sld [smem:[#allocation9 + $0x3]]
    %v126 = vstv %s125
    %v127 = vmul.f32 %v124, %v126
    %v128 = vadd.f32 %v114, %v127
    %s129 = sld [smem:[#allocation3 + $0x4]]
    %v130 = vstv %s129
    %v131 = vmul.f32 %v70, %v130
    %s132 = sld [smem:[#allocation7 + $0x4]]
    %v133 = vstv %s132
    %v134 = vadd.f32 %v131, %v133
    %v135 = vmul.f32 %v134, %v134
    %v136 = vmul.f32 %v135, -0.5
    %v137 = vmul.f32 %v136, 1.442695
    %v138 = vpow.pop %v137
    %s139 = sld [smem:[#allocation9 + $0x4]]
    %v140 = vstv %s139
    %v141 = vmul.f32 %v138, %v140
    %v142 = vadd.f32 %v128, %v141
    %143 = vst [vmem:[#allocation11] sm:$0xff] %v142
    // Predicated region
    $region38: #{tpu_custom_call.1} parent=1 // pred_check
      _
    $region39: #{tpu_custom_call.1} parent=1 // pred_check_branch
      %145 = sbr.rel (0) target = $region41
    $region40: #{tpu_custom_call.1} parent=1 // pred_region
      %s147 = ssub.s32 128, 128
      %148 = vsyncadd [#allocation5], %s147
      %s150 = sshll.u32 [#allocation11], 4
      %s151 = int_to_ptr.vmem [resolvable:$true] %s150
      %153 = dma.vmem_to_hbm [thread:$0]  %s151, 128, %s5, [#allocation5]
    $region41: #{tpu_custom_call.1} parent=1 // pred_fallthru
      _
    // Predicated region
    $region42: #{tpu_custom_call.1} parent=1 // pred_check
      _
    $region43: #{tpu_custom_call.1} parent=1 // pred_check_branch
      %155 = sbr.rel (0) target = $region45
    $region44: #{tpu_custom_call.1} parent=1 // pred_region
      %156 = dma.done [#allocation5], 128
    $region45: #{tpu_custom_call.1} parent=1 // pred_fallthru
      _
    %157 = vsyncpa [#allocation4], 1
    %158 = vsyncpa [#allocation5], 1
    %159 = vsyncpa [#allocation6], 1
    %160 = vsyncpa [#allocation8], 1

</llo_original>
